<compile_context>
chip_gen: v7x
topology: tpu7x:2x2x1
jax: 0.10.0
libtpu: 0.0.40
codegen_flags: <defaults>
</compile_context>

<pallas_src>
import functools

import jax
import jax.numpy as jnp
from jax.experimental import pallas as pl
from jax.experimental.pallas import tpu as pltpu

_INV_SQRT2 = 0.7071067811865476


def _ffn_kernel(x_ref, w1_ref, b1_ref, w2_ref, b2_ref, o_ref, acc_ref):
    """One (row-tile, hidden-chunk) step of the fused FFN.

    x_ref : (tm, dim)   activation row tile
    w1_ref: (tk, dim)   first-linear weight chunk  (PyTorch layout, leading-axis slab)
    b1_ref: (1, tk)     first-linear bias chunk
    w2_ref: (tk, dim)   second-linear weight chunk (transposed PyTorch weight, leading-axis slab)
    b2_ref: (1, dim)    second-linear bias (full, applied once at k == last)
    o_ref : (tm, dim)   output row tile
    acc_ref: (tm, dim)  f32 accumulator scratch (resident across the hidden axis)
    """
    k = pl.program_id(1)

    @pl.when(k == 0)
    def _():
        acc_ref[...] = jnp.zeros_like(acc_ref)

    # Linear 1 chunk: (tm, dim) · (tk, dim)^T -> (tm, tk), f32 accumulation on the MXU.
    h = jax.lax.dot_general(
        x_ref[...], w1_ref[...],
        dimension_numbers=(((1,), (1,)), ((), ())),
        preferred_element_type=jnp.float32)
    h = h + b1_ref[...].astype(jnp.float32)

    # Exact (erf) GELU — matches PyTorch nn.GELU() default numerics.
    h = 0.5 * h * (1.0 + jax.lax.erf(h * _INV_SQRT2))

    # Dropout(p=0.0) is the identity -> no-op.
    # TODO(synk): Dropout with p > 0 (training mode) would need pltpu.prng_seed/prng_random_bits.

    # Linear 2 chunk: (tm, tk) @ (tk, dim) accumulated into the f32 scratch.
    acc_ref[...] += jnp.dot(h.astype(w2_ref.dtype), w2_ref[...],
                            preferred_element_type=jnp.float32)

    @pl.when(k == pl.num_programs(1) - 1)
    def _():
        o_ref[...] = (acc_ref[...] + b2_ref[...].astype(jnp.float32)).astype(o_ref.dtype)


def _round_up(x, m):
    return (x + m - 1) // m * m


def _vmem_capacity_bytes():
    """Physical VMEM per TensorCore; conservative (v7x, 64 MiB) fallback if the query fails."""
    try:
        cap = int(pltpu.get_tpu_info().vmem_capacity_bytes)
        if cap > 0:
            return cap
    except Exception:
        pass
    return 64 * 1024 * 1024


def _choose_tm(n_rows, tm_max, row_align):
    """Row tile: aligned, >= 2 tiles when possible (v7x megacore), bounded padding waste."""
    tm_max = max(row_align, (tm_max // row_align) * row_align)
    if n_rows <= row_align:
        return row_align
    if n_rows <= 2 * tm_max:
        # Small/medium batch: split into (at least) two row tiles so both cores get work.
        tm = _round_up(-(-n_rows // 2), row_align)
        return min(tm, tm_max)
    # Large batch: biggest aligned tile with <= ~10% padding waste.
    for tm in range(tm_max, row_align - 1, -row_align):
        n_pad = _round_up(n_rows, tm)
        if (n_pad - n_rows) <= 0.10 * n_pad:
            return tm
    return row_align


def _choose_tk(hidden, tk_cap, k_align):
    """Hidden-axis chunk. Single chunk (weight-resident) when it fits; otherwise k_align-aligned
    chunks (the caller zero-pads the hidden axis to a multiple of tk — numerically exact)."""
    if hidden <= tk_cap:
        return _round_up(hidden, 8)
    n_k = -(-hidden // tk_cap)
    tk = _round_up(-(-hidden // n_k), k_align)
    while tk > tk_cap:
        n_k += 1
        tk = _round_up(-(-hidden // n_k), k_align)
    return tk


def _select_tiles(n_rows, dim, hidden, x_it, w_it, out_it,
                  tm_max, tk_max, vmem_budget, row_align):
    """Pick (tm, tk) so the double-buffered working set fits under the per-generation budget."""
    tm = _choose_tm(n_rows, tm_max, row_align)
    while True:
        fixed = (2 * tm * dim * x_it            # x tiles (double-buffered)
                 + 2 * tm * dim * out_it        # out tiles (double-buffered)
                 + tm * dim * 4                 # f32 accumulator scratch
                 + 4 * max(dim, 128) * 4)       # b2 + misc slack
        per_tk = 2 * 2 * dim * w_it + 2 * 8 * 4  # w1+w2 chunks (x2 buffers) + b1 chunk rows
        avail = vmem_budget - fixed
        tk_cap = avail // per_tk if avail > 0 else 0
        if tk_cap >= 128 or tm <= row_align:
            break
        tm = max(row_align, ((tm // 2) // row_align) * row_align)
    tk_cap = int(max(128, min(tk_max, tk_cap)))
    k_align = 256 if tk_cap >= 256 else 128     # 256-aligned contraction tiles for v6e/v7x MXU
    tk = _choose_tk(hidden, tk_cap, k_align)
    return tm, tk


@functools.partial(jax.jit, static_argnames=("tm_max", "tk_max", "mxu_dtype"))
def feed_forward(x, w1, b1, w2, b2, *, tm_max=512, tk_max=1024, mxu_dtype=None):
    """Fused Linear -> GELU -> Dropout(0) -> Linear -> Dropout(0).

    x : (..., dim)
    w1: (hidden, dim)  -- same layout as PyTorch nn.Linear(dim, hidden).weight
    b1: (hidden,) or (1, hidden)
    w2: (hidden, dim)  -- transpose of PyTorch nn.Linear(hidden, dim).weight
    b2: (dim,) or (1, dim)
    mxu_dtype: e.g. jnp.bfloat16 to feed the MXU bf16 operands (f32 accumulation); None keeps
               the input dtype end-to-end (PyTorch-exact for f32 inputs).
    """
    orig_shape = x.shape
    dim = orig_shape[-1]
    hidden = w1.shape[0]
    out_dtype = x.dtype

    x2d = x.reshape(-1, dim)
    n_rows = x2d.shape[0]
    b1 = b1.reshape(1, -1)
    b2 = b2.reshape(1, -1)

    if mxu_dtype is not None:
        x2d = x2d.astype(mxu_dtype)
        w1 = w1.astype(mxu_dtype)
        w2 = w2.astype(mxu_dtype)

    x_it = x2d.dtype.itemsize
    w_it = w1.dtype.itemsize
    out_it = jnp.dtype(out_dtype).itemsize
    row_align = {4: 8, 2: 16, 1: 32}.get(x_it, 8)   # sub-32-bit dtypes pack along sublanes

    vmem_cap = _vmem_capacity_bytes()               # 64 MiB on v7x, 128 MiB on v5e/v6e
    vmem_budget = int(0.85 * vmem_cap)

    tm, tk = _select_tiles(n_rows, dim, hidden, x_it, w_it, out_it,
                           tm_max, tk_max, vmem_budget, row_align)

    n_pad = _round_up(n_rows, tm)
    hidden_pad = _round_up(hidden, tk)
    if n_pad != n_rows:
        x2d = jnp.pad(x2d, ((0, n_pad - n_rows), (0, 0)))
    if hidden_pad != hidden:
        # Zero-padded hidden units contribute gelu(0) = 0 downstream -> exact.
        w1 = jnp.pad(w1, ((0, hidden_pad - hidden), (0, 0)))
        w2 = jnp.pad(w2, ((0, hidden_pad - hidden), (0, 0)))
        b1 = jnp.pad(b1, ((0, 0), (0, hidden_pad - hidden)))

    n_row_tiles = n_pad // tm
    n_k = hidden_pad // tk
    grid = (n_row_tiles, n_k)

    # Deeper weight buffering only where VMEM headroom exists (v5e/v6e class) and it matters.
    w_bufs = 2
    if n_k >= 2 and vmem_cap >= 96 * 1024 * 1024:
        fixed = 2 * tm * dim * x_it + 2 * tm * dim * out_it + tm * dim * 4 + 4 * max(dim, 128) * 4
        per_buf = 2 * tk * dim * w_it + 8 * tk * 4
        if fixed + 3 * per_buf <= vmem_budget:
            w_bufs = 3

    def _w_spec():
        if w_bufs == 3:
            return pl.BlockSpec((tk, dim), lambda i, k: (k, 0), pipeline_mode=pl.Buffered(3))
        return pl.BlockSpec((tk, dim), lambda i, k: (k, 0))

    # Advisory cost estimate: weights (and b1) are re-streamed once per row tile.
    bytes_accessed = (x2d.size * x_it + n_pad * dim * out_it
                      + (w1.size * w_it + w2.size * w_it
                         + b1.size * b1.dtype.itemsize) * n_row_tiles
                      + b2.size * b2.dtype.itemsize)
    cost = pl.CostEstimate(flops=4 * n_pad * dim * hidden_pad,
                           transcendentals=n_pad * hidden_pad,
                           bytes_accessed=int(bytes_accessed))

    vmem_limit = int(min(0.9 * vmem_cap, max(vmem_budget, 32 * 1024 * 1024)))

    out2d = pl.pallas_call(
        _ffn_kernel,
        out_shape=jax.ShapeDtypeStruct((n_pad, dim), out_dtype),
        grid_spec=pltpu.PrefetchScalarGridSpec(
            num_scalar_prefetch=0,
            grid=grid,
            in_specs=[
                pl.BlockSpec((tm, dim), lambda i, k: (i, 0)),   # x row tile
                _w_spec(),                                      # w1 chunk (leading-axis slab)
                pl.BlockSpec((1, tk), lambda i, k: (0, k)),     # b1 chunk
                _w_spec(),                                      # w2 chunk (leading-axis slab)
                pl.BlockSpec((1, dim), lambda i, k: (0, 0)),    # b2 (full)
            ],
            out_specs=pl.BlockSpec((tm, dim), lambda i, k: (i, 0)),
            scratch_shapes=[pltpu.VMEM((tm, dim), jnp.float32)],
        ),
        compiler_params=pltpu.CompilerParams(
            dimension_semantics=("parallel", "arbitrary"),
            vmem_limit_bytes=vmem_limit,
        ),
        cost_estimate=cost,
    )(x2d, w1, b1, w2, b2)

    return out2d[:n_rows].reshape(orig_shape)


def init_params(key, dim, hidden_dim, dtype=jnp.float32):
    """Synthetic init mimicking nn.Linear; w1/w2 both stored (hidden, dim)."""
    k1, k2, k3, k4 = jax.random.split(key, 4)
    lim1 = 1.0 / jnp.sqrt(dim)
    lim2 = 1.0 / jnp.sqrt(hidden_dim)
    w1 = jax.random.uniform(k1, (hidden_dim, dim), dtype, -lim1, lim1)   # nn.Linear(dim, hidden).weight
    b1 = jax.random.uniform(k2, (1, hidden_dim), dtype, -lim1, lim1)
    w2 = jax.random.uniform(k3, (hidden_dim, dim), dtype, -lim2, lim2)   # nn.Linear(hidden, dim).weight.T
    b2 = jax.random.uniform(k4, (1, dim), dtype, -lim2, lim2)
    return w1, b1, w2, b2


def _reference(x, w1, b1, w2, b2):
    dim = x.shape[-1]
    h = x.reshape(-1, dim) @ w1.T + b1.reshape(1, -1)
    h = 0.5 * h * (1.0 + jax.lax.erf(h * _INV_SQRT2))
    return (h @ w2 + b2.reshape(1, -1)).reshape(x.shape)


if __name__ == "__main__":
    key = jax.random.PRNGKey(0)
    kx, kp, kx2 = jax.random.split(key, 3)

    # Case 1: small, evenly divisible token count (f32, PyTorch-exact path).
    batch, seq, dim, hidden_dim = 2, 8, 32, 64
    x = jax.random.normal(kx, (batch, seq, dim), jnp.float32)
    w1, b1, w2, b2 = init_params(kp, dim, hidden_dim)

    out = jax.block_until_ready(feed_forward(x, w1, b1, w2, b2))
    ref = _reference(x, w1, b1, w2, b2)
    assert out.shape == (batch, seq, dim)
    assert jnp.allclose(out, ref, atol=1e-5, rtol=1e-5), "mismatch vs reference (case 1)"

    # Case 2: token count not divisible by the row tile (exercises padding path).
    x2 = jax.random.normal(kx2, (3, 5, dim), jnp.float32)
    out2 = jax.block_until_ready(feed_forward(x2, w1, b1, w2, b2))
    ref2 = _reference(x2, w1, b1, w2, b2)
    assert out2.shape == (3, 5, dim)
    assert jnp.allclose(out2, ref2, atol=1e-5, rtol=1e-5), "mismatch vs reference (case 2)"

    # Case 3: bf16 MXU fast path (f32 accumulation), checked at bf16 tolerance.
    out3 = jax.block_until_ready(feed_forward(x, w1, b1, w2, b2, mxu_dtype=jnp.bfloat16))
    assert out3.shape == (batch, seq, dim) and out3.dtype == x.dtype
    assert jnp.allclose(out3, ref, atol=5e-2, rtol=5e-2), "mismatch vs reference (case 3, bf16)"

    print("KERNEL_OK")
</pallas_src>

<mosaic_0001>
module attributes {stable_mosaic.version = 11 : i64} {
  func.func @_ffn_kernel(%arg0: i32, %arg1: i32, %arg2: memref<8x32xf32, #tpu.memory_space<vmem>>, %arg3: memref<64x32xf32, #tpu.memory_space<vmem>>, %arg4: memref<1x64xf32, #tpu.memory_space<vmem>>, %arg5: memref<64x32xf32, #tpu.memory_space<vmem>>, %arg6: memref<1x32xf32, #tpu.memory_space<vmem>>, %arg7: memref<8x32xf32, #tpu.memory_space<vmem>>, %arg8: memref<8x32xf32, #tpu.memory_space<vmem>>) attributes {dimension_semantics = [#tpu.dimension_semantics<parallel>, #tpu.dimension_semantics<arbitrary>], iteration_bounds = array<i64: 2, 1>, scalar_prefetch = 0 : i64, scratch_operands = 1 : i64, tpu.core_type = #tpu.core_type<tc>, window_params = [{transform_indices = @transform_0, window_bounds = array<i64: 8, 32>}, {transform_indices = @transform_1, window_bounds = array<i64: 64, 32>}, {transform_indices = @transform_2, window_bounds = array<i64: 1, 64>}, {transform_indices = @transform_3, window_bounds = array<i64: 64, 32>}, {pipeline_mode = #tpu.pipeline_mode<synchronous>, transform_indices = @transform_4, window_bounds = array<i64: 1, 32>}, {transform_indices = @transform_5, window_bounds = array<i64: 8, 32>}]} {
    %c0_i32 = arith.constant 0 : i32
    %0 = arith.cmpi eq, %arg1, %c0_i32 : i32
    %1 = arith.extui %0 : i1 to i32
    %c0_i32_0 = arith.constant 0 : i32
    %2 = arith.cmpi ne, %1, %c0_i32_0 : i32
    scf.if %2 {
      %cst_18 = arith.constant 0.000000e+00 : f32
      %25 = vector.broadcast %cst_18 : f32 to vector<8x32xf32>
      %c0_19 = arith.constant 0 : index
      %c0_20 = arith.constant 0 : index
      %26 = vector.load %arg8[%c0_19, %c0_20] : memref<8x32xf32, #tpu.memory_space<vmem>>, vector<8x32xf32>
      tpu.vector_store %arg8[%c0_19, %c0_20], %25 {strides = array<i32>} : memref<8x32xf32, #tpu.memory_space<vmem>>, vector<8x32xf32>,
    } else {
    }
    %c0 = arith.constant 0 : index
    %c0_1 = arith.constant 0 : index
    %3 = vector.load %arg2[%c0, %c0_1] : memref<8x32xf32, #tpu.memory_space<vmem>>, vector<8x32xf32>
    %c0_2 = arith.constant 0 : index
    %c0_3 = arith.constant 0 : index
    %4 = vector.load %arg3[%c0_2, %c0_3] : memref<64x32xf32, #tpu.memory_space<vmem>>, vector<64x32xf32>
    %cst = arith.constant dense<0.000000e+00> : vector<8x64xf32>
    %5 = tpu.matmul %3, %4, %cst {dimension_numbers = #tpu.dot_dimension_numbers<[1], [1], [0], [0], [0, 0, 1, 0], [], []>} : vector<8x32xf32>, vector<64x32xf32>, vector<8x64xf32> -> vector<8x64xf32>
    %c0_4 = arith.constant 0 : index
    %c0_5 = arith.constant 0 : index
    %6 = vector.load %arg4[%c0_4, %c0_5] : memref<1x64xf32, #tpu.memory_space<vmem>>, vector<1x64xf32>
    %7 = vector.broadcast %6 : vector<1x64xf32> to vector<8x64xf32>
    %8 = arith.addf %5, %7 : vector<8x64xf32>
    %cst_6 = arith.constant 5.000000e-01 : f32
    %9 = vector.broadcast %cst_6 : f32 to vector<8x64xf32>
    %10 = arith.mulf %9, %8 : vector<8x64xf32>
    %cst_7 = arith.constant 0.707106769 : f32
    %11 = vector.broadcast %cst_7 : f32 to vector<8x64xf32>
    %12 = arith.mulf %8, %11 : vector<8x64xf32>
    %13 = math.erf %12 : vector<8x64xf32>
    %cst_8 = arith.constant 1.000000e+00 : f32
    %14 = vector.broadcast %cst_8 : f32 to vector<8x64xf32>
    %15 = arith.addf %14, %13 : vector<8x64xf32>
    %16 = arith.mulf %10, %15 : vector<8x64xf32>
    %c0_9 = arith.constant 0 : index
    %c0_10 = arith.constant 0 : index
    %17 = vector.load %arg8[%c0_9, %c0_10] : memref<8x32xf32, #tpu.memory_space<vmem>>, vector<8x32xf32>
    %c0_11 = arith.constant 0 : index
    %c0_12 = arith.constant 0 : index
    %18 = vector.load %arg5[%c0_11, %c0_12] : memref<64x32xf32, #tpu.memory_space<vmem>>, vector<64x32xf32>
    %cst_13 = arith.constant dense<0.000000e+00> : vector<8x32xf32>
    %19 = tpu.matmul %16, %18, %cst_13 {dimension_numbers = #tpu.dot_dimension_numbers<[1], [0], [0], [1], [0, 0, 1, 1], [], []>} : vector<8x64xf32>, vector<64x32xf32>, vector<8x32xf32> -> vector<8x32xf32>
    %20 = arith.addf %17, %19 : vector<8x32xf32>
    %c0_14 = arith.constant 0 : index
    %c0_15 = arith.constant 0 : index
    %21 = vector.load %arg8[%c0_14, %c0_15] : memref<8x32xf32, #tpu.memory_space<vmem>>, vector<8x32xf32>
    tpu.vector_store %arg8[%c0_14, %c0_15], %20 {strides = array<i32>} : memref<8x32xf32, #tpu.memory_space<vmem>>, vector<8x32xf32>,
    %c0_i32_16 = arith.constant 0 : i32
    %22 = arith.cmpi eq, %arg1, %c0_i32_16 : i32
    %23 = arith.extui %22 : i1 to i32
    %c0_i32_17 = arith.constant 0 : i32
    %24 = arith.cmpi ne, %23, %c0_i32_17 : i32
    scf.if %24 {
      %c0_18 = arith.constant 0 : index
      %c0_19 = arith.constant 0 : index
      %25 = vector.load %arg8[%c0_18, %c0_19] : memref<8x32xf32, #tpu.memory_space<vmem>>, vector<8x32xf32>
      %c0_20 = arith.constant 0 : index
      %c0_21 = arith.constant 0 : index
      %26 = vector.load %arg6[%c0_20, %c0_21] : memref<1x32xf32, #tpu.memory_space<vmem>>, vector<1x32xf32>
      %27 = vector.broadcast %26 : vector<1x32xf32> to vector<8x32xf32>
      %28 = arith.addf %25, %27 : vector<8x32xf32>
      %c0_22 = arith.constant 0 : index
      %c0_23 = arith.constant 0 : index
      %29 = vector.load %arg7[%c0_22, %c0_23] : memref<8x32xf32, #tpu.memory_space<vmem>>, vector<8x32xf32>
      tpu.vector_store %arg7[%c0_22, %c0_23], %28 {strides = array<i32>} : memref<8x32xf32, #tpu.memory_space<vmem>>, vector<8x32xf32>,
    } else {
    }
    return
  }
  func.func @transform_0(%arg0: i32, %arg1: i32) -> (i32, i32) {
    %c0_i32 = arith.constant 0 : i32
    %c0_i32_0 = arith.constant 0 : i32
    return %arg0, %c0_i32 : i32, i32
  }
  func.func @transform_1(%arg0: i32, %arg1: i32) -> (i32, i32) {
    %c0_i32 = arith.constant 0 : i32
    %c0_i32_0 = arith.constant 0 : i32
    return %arg1, %c0_i32 : i32, i32
  }
  func.func @transform_2(%arg0: i32, %arg1: i32) -> (i32, i32) {
    %c0_i32 = arith.constant 0 : i32
    %c0_i32_0 = arith.constant 0 : i32
    return %c0_i32, %arg1 : i32, i32
  }
  func.func @transform_3(%arg0: i32, %arg1: i32) -> (i32, i32) {
    %c0_i32 = arith.constant 0 : i32
    %c0_i32_0 = arith.constant 0 : i32
    return %arg1, %c0_i32 : i32, i32
  }
  func.func @transform_4(%arg0: i32, %arg1: i32) -> (i32, i32) {
    %c0_i32 = arith.constant 0 : i32
    %c0_i32_0 = arith.constant 0 : i32
    %c0_i32_1 = arith.constant 0 : i32
    return %c0_i32, %c0_i32_0 : i32, i32
  }
  func.func @transform_5(%arg0: i32, %arg1: i32) -> (i32, i32) {
    %c0_i32 = arith.constant 0 : i32
    %c0_i32_0 = arith.constant 0 : i32
    return %arg0, %c0_i32 : i32, i32
  }
}

</mosaic_0001>

<llo_original>
// kernel: feed_forward.1
$region0: #{feed_forward.1}
  #allocation0 [shape = 'u32[]', space=smem, size = 0x4, offset = 0x4, fixed_abs, tag = 'smem constant byte address 0x4 - core index']
  #allocation1 [shape = 'u32[144,128]{1,0:T(1,128)}', space=vmem, size = 0x12000, scoped, tag = 'internal scratch']
  #allocation2 [shape = 'f32[8,32]{1,0:T(8,128)}', space=vmem, size = 0x1000, scoped, tag = 'scratch operand']
  %s0 = inlined_call_operand.vmem [shape: f32[16,32], index: 0, kind: input, shape index: {}]
  %s1 = inlined_call_operand.vmem [shape: f32[64,32], index: 1, kind: input, shape index: {}]
  %s2 = inlined_call_operand.vmem [shape: f32[1,64], index: 2, kind: input, shape index: {}]
  %s3 = inlined_call_operand.vmem [shape: f32[64,32], index: 3, kind: input, shape index: {}]
  %s4 = inlined_call_operand.vmem [shape: f32[1,32], index: 4, kind: input, shape index: {}]
  %s5 = inlined_call_operand.hbm [shape: f32[16,32], index: 5, kind: output, shape index: {}]
  %s6 = sld [smem:[#allocation0]]
  $region61: #{feed_forward.1} parent=0
    _
  %s8 = ssub.s32 1, %s6
  %s9 = scalar_select 0, %s8, %s6
  $region1: #{feed_forward.1} parent=0
    #allocation3 [shape = 'u8[8192]{0}', space=vmem, size = 0x2000, scoped, tag = 'output window, operand 0']
    #allocation4 [shape = 's32[2]{0}', space=sflag, size = 0x8, scoped, tag = 'scoped memory for feed_forward.1']
    %10 = vsyncpa [#allocation4], 0
    %s11 = scalar_lea.sflag [#allocation4], 1
    %12 = vsyncpa %s11, 0
    loop: start=0, step=1, limit=4
    $region2: #{feed_forward.1} parent=1 // loop_pre_header
      _
    $region3: #{feed_forward.1} parent=1 // loop_header
      %s14 = sphi 0, %s18
      %p15 = scmp.ge.s32.totalorder %s14, 4
      %s21 = sphi 0, %s33
      %s22 = sphi 0, %s29
      %s23 = sphi 0, %s21
      %s24 = sphi 0, %s22
      %s25 = sphi 0, %s23
      %s26 = sphi 0, %s24
      %s36 = sphi 0, %s38
      %s39 = sphi 0, %s36
      %s40 = sphi 0, %s39
      %s56 = sphi 0, %s40
      %s62 = sphi 0, %s64
      %s65 = sphi 0, %s62
      %s66 = sphi 0, %s65
      %s82 = sphi 0, %s66
      %s88 = sphi 0, %s90
      %s91 = sphi 0, %s88
      %s92 = sphi 0, %s91
      %s108 = sphi 0, %s92
      %s114 = sphi 0, %s116
      %s117 = sphi 0, %s114
      %s118 = sphi 0, %s117
      %s134 = sphi 0, %s118
      %s138 = sphi 0, %s138
      %s140 = sphi 0, %s138
      %s141 = sphi 0, %s140
      %s155 = sphi 0, %s141
      %s161 = sphi 0, %s163
      %s164 = sphi 0, %s161
      %s165 = sphi 0, %s164
      %s181 = sphi 0, %s165
    $region4: #{feed_forward.1} parent=1 // loop_header_branch
      %17 = sbr.rel (%p15) target = $region8
    $region5: #{feed_forward.1} parent=1 // loop_body
      %s19 = ssub.s32 %s14, 1
      %s20 = ssub.s32 %s14, 2
      %s27 = sadd.s32 1, %s22
      %p28 = scmp.ge.s32.totalorder %s27, 1
      %s29 = scalar_select %p28, 0, %s27
      %s30 = sadd.s32 1, %s21
      %s31 = scalar_select %p28, %s30, %s21
      %p32 = scmp.ge.s32.totalorder %s31, 2
      %s33 = scalar_select %p32, 0, %s31
      %s34 = ssub.s32 %s21, %s33
      %p35 = scmp.eq.s32.totalorder %s34, 0
      %s37 = sadd.s32 %s36, 1
      %s38 = scalar_select %p35, %s36, %s37
      %p41 = pneg %p35
      %p42 = scmp.eq.s32.totalorder %s14, 1
      %p43 = por %p41, %p42
      %p44 = scmp.ne.s32.totalorder %s36, %s39
      %p45 = scmp.eq.s32.totalorder %s14, 0
      %p46 = por %p44, %p45
      %p47 = scmp.ne.s32.totalorder %s36, %s39
      %p48 = scmp.eq.s32.totalorder %s19, 1
      %p49 = por %p47, %p48
      %p50 = scmp.ne.s32.totalorder %s39, %s40
      %p51 = scmp.eq.s32.totalorder %s19, 0
      %p52 = por %p50, %p51
      %p53 = scmp.ne.s32.totalorder %s39, %s40
      %p54 = scmp.eq.s32.totalorder %s20, 1
      %p55 = por %p53, %p54
      %p57 = scmp.ne.s32.totalorder %s40, %s56
      %p58 = scmp.eq.s32.totalorder %s20, 0
      %p59 = por %p57, %p58
      %s60 = ssub.s32 %s22, %s29
      %p61 = scmp.eq.s32.totalorder %s60, 0
      %s63 = sadd.s32 %s62, 1
      %s64 = scalar_select %p61, %s62, %s63
      %p67 = pneg %p61
      %p68 = scmp.eq.s32.totalorder %s14, 1
      %p69 = por %p67, %p68
      %p70 = scmp.ne.s32.totalorder %s62, %s65
      %p71 = scmp.eq.s32.totalorder %s14, 0
      %p72 = por %p70, %p71
      %p73 = scmp.ne.s32.totalorder %s62, %s65
      %p74 = scmp.eq.s32.totalorder %s19, 1
      %p75 = por %p73, %p74
      %p76 = scmp.ne.s32.totalorder %s65, %s66
      %p77 = scmp.eq.s32.totalorder %s19, 0
      %p78 = por %p76, %p77
      %p79 = scmp.ne.s32.totalorder %s65, %s66
      %p80 = scmp.eq.s32.totalorder %s20, 1
      %p81 = por %p79, %p80
      %p83 = scmp.ne.s32.totalorder %s66, %s82
      %p84 = scmp.eq.s32.totalorder %s20, 0
      %p85 = por %p83, %p84
      %s86 = ssub.s32 %s22, %s29
      %p87 = scmp.eq.s32.totalorder %s86, 0
      %s89 = sadd.s32 %s88, 1
      %s90 = scalar_select %p87, %s88, %s89
      %p93 = pneg %p87
      %p94 = scmp.eq.s32.totalorder %s14, 1
      %p95 = por %p93, %p94
      %p96 = scmp.ne.s32.totalorder %s88, %s91
      %p97 = scmp.eq.s32.totalorder %s14, 0
      %p98 = por %p96, %p97
      %p99 = scmp.ne.s32.totalorder %s88, %s91
      %p100 = scmp.eq.s32.totalorder %s19, 1
      %p101 = por %p99, %p100
      %p102 = scmp.ne.s32.totalorder %s91, %s92
      %p103 = scmp.eq.s32.totalorder %s19, 0
      %p104 = por %p102, %p103
      %p105 = scmp.ne.s32.totalorder %s91, %s92
      %p106 = scmp.eq.s32.totalorder %s20, 1
      %p107 = por %p105, %p106
      %p109 = scmp.ne.s32.totalorder %s92, %s108
      %p110 = scmp.eq.s32.totalorder %s20, 0
      %p111 = por %p109, %p110
      %s112 = ssub.s32 %s22, %s29
      %p113 = scmp.eq.s32.totalorder %s112, 0
      %s115 = sadd.s32 %s114, 1
      %s116 = scalar_select %p113, %s114, %s115
      %p119 = pneg %p113
      %p120 = scmp.eq.s32.totalorder %s14, 1
      %p121 = por %p119, %p120
      %p122 = scmp.ne.s32.totalorder %s114, %s117
      %p123 = scmp.eq.s32.totalorder %s14, 0
      %p124 = por %p122, %p123
      %p125 = scmp.ne.s32.totalorder %s114, %s117
      %p126 = scmp.eq.s32.totalorder %s19, 1
      %p127 = por %p125, %p126
      %p128 = scmp.ne.s32.totalorder %s117, %s118
      %p129 = scmp.eq.s32.totalorder %s19, 0
      %p130 = por %p128, %p129
      %p131 = scmp.ne.s32.totalorder %s117, %s118
      %p132 = scmp.eq.s32.totalorder %s20, 1
      %p133 = por %p131, %p132
      %p135 = scmp.ne.s32.totalorder %s118, %s134
      %p136 = scmp.eq.s32.totalorder %s20, 0
      %p137 = por %p135, %p136
      %s139 = sadd.s32 %s138, 1
      %p142 = scmp.eq.s32.totalorder %s14, 1
      %p143 = scmp.ne.s32.totalorder %s138, %s140
      %p144 = scmp.eq.s32.totalorder %s14, 0
      %p145 = por %p143, %p144
      %p146 = scmp.ne.s32.totalorder %s138, %s140
      %p147 = scmp.eq.s32.totalorder %s19, 1
      %p148 = por %p146, %p147
      %p149 = scmp.ne.s32.totalorder %s140, %s141
      %p150 = scmp.eq.s32.totalorder %s19, 0
      %p151 = por %p149, %p150
      %p152 = scmp.ne.s32.totalorder %s140, %s141
      %p153 = scmp.eq.s32.totalorder %s20, 1
      %p154 = por %p152, %p153
      %p156 = scmp.ne.s32.totalorder %s141, %s155
      %p157 = scmp.eq.s32.totalorder %s20, 0
      %p158 = por %p156, %p157
      %s159 = ssub.s32 %s21, %s33
      %p160 = scmp.eq.s32.totalorder %s159, 0
      %s162 = sadd.s32 %s161, 1
      %s163 = scalar_select %p160, %s161, %s162
      %p166 = pneg %p160
      %p167 = scmp.eq.s32.totalorder %s14, 1
      %p168 = por %p166, %p167
      %p169 = scmp.ne.s32.totalorder %s161, %s164
      %p170 = scmp.eq.s32.totalorder %s14, 0
      %p171 = por %p169, %p170
      %p172 = scmp.ne.s32.totalorder %s161, %s164
      %p173 = scmp.eq.s32.totalorder %s19, 1
      %p174 = por %p172, %p173
      %p175 = scmp.ne.s32.totalorder %s164, %s165
      %p176 = scmp.eq.s32.totalorder %s19, 0
      %p177 = por %p175, %p176
      %p178 = scmp.ne.s32.totalorder %s164, %s165
      %p179 = scmp.eq.s32.totalorder %s20, 1
      %p180 = por %p178, %p179
      %p182 = scmp.ne.s32.totalorder %s165, %s181
      %p183 = scmp.eq.s32.totalorder %s20, 0
      %p184 = por %p182, %p183
      %p185 = scmp.le.s32.totalorder 1, %s14
      %p186 = scmp.lt.s32.totalorder %s14, 3
      %p187 = pnand %p185, %p186
      %p188 = pneg %p187
      // Predicated region
      $region9: #{feed_forward.1} parent=5 // pred_check
        _
      $region10: #{feed_forward.1} parent=5 // pred_check_branch
        %190 = sbr.rel (%p187) target = $region12
      $region11: #{feed_forward.1} parent=5 // pred_region
        %s191 = ssub.s32 %s14, 1
        // Predicated region
        $region13: #{feed_forward.1} parent=11 // pred_check
          %p192 = pneg %p78
        $region14: #{feed_forward.1} parent=11 // pred_check_branch
          %194 = sbr.rel (%p192) target = $region16
        $region15: #{feed_forward.1} parent=11 // pred_region
          %s195 = smul.u32 8, %s24
          %p196 = scmp.lt.s32.totalorder %s195, 7
          %s197 = scalar_select %p196, %s195, 7
          %s198 = smul.addr %s197, 8
          %s199 = scalar_lea.vmem %s1, %s198
          %s200 = smul.u32 8, %s24
        $region16: #{feed_forward.1} parent=11 // pred_fallthru
          _
        // Predicated region
        $region17: #{feed_forward.1} parent=11 // pred_check
          %p201 = pneg %p104
        $region18: #{feed_forward.1} parent=11 // pred_check_branch
          %203 = sbr.rel (%p201) target = $region20
        $region19: #{feed_forward.1} parent=11 // pred_region
          %p204 = scmp.lt.s32.totalorder %s24, 0
          %s205 = scalar_select %p204, %s24, 0
          %s206 = scalar_lea.vmem %s2, %s205
        $region20: #{feed_forward.1} parent=11 // pred_fallthru
          _
        // Predicated region
        $region21: #{feed_forward.1} parent=11 // pred_check
          %p207 = pneg %p130
        $region22: #{feed_forward.1} parent=11 // pred_check_branch
          %209 = sbr.rel (%p207) target = $region24
        $region23: #{feed_forward.1} parent=11 // pred_region
          %s210 = smul.u32 8, %s24
          %p211 = scmp.lt.s32.totalorder %s210, 7
          %s212 = scalar_select %p211, %s210, 7
          %s213 = smul.addr %s212, 8
          %s214 = scalar_lea.vmem %s3, %s213
          %s215 = smul.u32 8, %s24
        $region24: #{feed_forward.1} parent=11 // pred_fallthru
          _
        // Predicated region
        $region25: #{feed_forward.1} parent=11 // pred_check
          %p216 = pneg %p151
        $region26: #{feed_forward.1} parent=11 // pred_check_branch
          %218 = sbr.rel (%p216) target = $region28
        $region27: #{feed_forward.1} parent=11 // pred_region
          _
        $region28: #{feed_forward.1} parent=11 // pred_fallthru
          _
      $region12: #{feed_forward.1} parent=5 // pred_fallthru
        _
      %p219 = scmp.lt.s32.totalorder %s14, 2
      // Predicated region
      $region29: #{feed_forward.1} parent=5 // pred_check
        %p220 = pneg %p219
      $region30: #{feed_forward.1} parent=5 // pred_check_branch
        %222 = sbr.rel (%p220) target = $region32
      $region31: #{feed_forward.1} parent=5 // pred_region
        // Predicated region
        $region33: #{feed_forward.1} parent=31 // pred_check
          %p223 = pneg %p46
        $region34: #{feed_forward.1} parent=31 // pred_check_branch
          %225 = sbr.rel (%p223) target = $region36
        $region35: #{feed_forward.1} parent=31 // pred_region
          %p226 = scmp.lt.s32.totalorder %s21, 1
          %s227 = scalar_select %p226, %s21, 1
          %s228 = smul.addr %s227, 8
          %s229 = scalar_lea.vmem %s0, %s228
        $region36: #{feed_forward.1} parent=31 // pred_fallthru
          _
      $region32: #{feed_forward.1} parent=5 // pred_fallthru
        _
      %p230 = scmp.le.s32.totalorder 1, %s14
      %p231 = scmp.lt.s32.totalorder %s14, 3
      %p232 = pnand %p230, %p231
      %p233 = pneg %p232
      // Predicated region
      $region37: #{feed_forward.1} parent=5 // pred_check
        _
      $region38: #{feed_forward.1} parent=5 // pred_check_branch
        %235 = sbr.rel (%p232) target = $region40
      $region39: #{feed_forward.1} parent=5 // pred_region
        %s236 = ssub.s32 %s14, 1
        %p237 = scmp.lt.s32.totalorder %s23, 1
        %s238 = scalar_select %p237, %s23, 1
        %s239 = smul.addr %s238, 8
        %s240 = scalar_lea.vmem %s0, %s239
        %p241 = pneg %p52
        %p242 = pneg %p49
        %s243 = smul.u32 8, %s24
        %p244 = scmp.lt.s32.totalorder %s243, 7
        %s245 = scalar_select %p244, %s243, 7
        %s246 = smul.addr %s245, 8
        %s247 = scalar_lea.vmem %s1, %s246
        %p248 = pneg %p78
        %p249 = pneg %p75
        %p250 = scmp.lt.s32.totalorder %s24, 0
        %s251 = scalar_select %p250, %s24, 0
        %s252 = scalar_lea.vmem %s2, %s251
        %p253 = pneg %p104
        %p254 = pneg %p101
        %s255 = smul.u32 8, %s24
        %p256 = scmp.lt.s32.totalorder %s255, 7
        %s257 = scalar_select %p256, %s255, 7
        %s258 = smul.addr %s257, 8
        %s259 = scalar_lea.vmem %s3, %s258
        %p260 = pneg %p130
        %p261 = pneg %p127
        %p262 = pneg %p151
        %p263 = pneg %p148
        %p264 = pneg %p177
        %p265 = pneg %p174
        %s266 = sand.u32 %s164, 1
        %s267 = scalar_lea.sflag [#allocation4], %s266
        %s268 = sand.u32 %s164, 1
        %s269 = smul.addr %s268, 8
        %s270 = scalar_lea.vmem [#allocation3], %s269
        %p271 = scmp.lt.s32.totalorder %s23, 1
        %s272 = scalar_select %p271, %s23, 1
        %s273 = smul.addr %s272, 8
        %s274 = scalar_lea.vmem %s0, %s273
        %s275 = smul.u32 8, %s24
        %p276 = scmp.lt.s32.totalorder %s275, 7
        %s277 = scalar_select %p276, %s275, 7
        %s278 = smul.addr %s277, 8
        %s279 = scalar_lea.vmem %s1, %s278
        %s280 = smul.u32 8, %s24
        %p281 = scmp.lt.s32.totalorder %s24, 0
        %s282 = scalar_select %p281, %s24, 0
        %s283 = scalar_lea.vmem %s2, %s282
        %s284 = smul.u32 8, %s24
        %p285 = scmp.lt.s32.totalorder %s284, 7
        %s286 = scalar_select %p285, %s284, 7
        %s287 = smul.addr %s286, 8
        %s288 = scalar_lea.vmem %s3, %s287
        %s289 = smul.u32 8, %s24
        %p290 = scmp.eq.s32.totalorder %s24, 0
        // Predicated region
        $region41: #{feed_forward.1} parent=39 // pred_check
          %p291 = pneg %p290
        $region42: #{feed_forward.1} parent=39 // pred_check_branch
          %293 = sbr.rel (%p291) target = $region44
        $region43: #{feed_forward.1} parent=39 // pred_region
          %vm294 = vcmask 261120
          %295 = vst.msk [vmem:[#allocation2] sm:$0xff] %vm294, 0.0
        $region44: #{feed_forward.1} parent=39 // pred_fallthru
          _
        %v296 = vld [vmem:[%s274] sm:$0xff]
        %v297 = vld [vmem:[%s279] sm:$0xff]
        %v298 = vld [vmem:[%s279 + $0x8] sm:$0xff]
        %v299 = vld [vmem:[%s279 + $0x10] sm:$0xff]
        %v300 = vld [vmem:[%s279 + $0x18] sm:$0xff]
        %v301 = vld [vmem:[%s279 + $0x20] sm:$0xff]
        %v302 = vld [vmem:[%s279 + $0x28] sm:$0xff]
        %v303 = vld [vmem:[%s279 + $0x30] sm:$0xff]
        %v304 = vld [vmem:[%s279 + $0x38] sm:$0xff]
        %v305 = vld [vmem:[%s283] sm:$0x1]
        %v307 = vlaneseq
        %v308 = vshrl.u32 %v307, 7
        %v309 = vsub.s32 0, %v308
        %v310 = vrot.slane %v305, %v309
        %vm312 = vcmask 261120
        %v314 = vsel %vm312, %v296, 0
        %v317 = vsel %vm312, %v297, 0
        %v320 = vsel %vm312, %v298, 0
        %v323 = vsel %vm312, %v299, 0
        %v326 = vsel %vm312, %v300, 0
        %v329 = vsel %vm312, %v301, 0
        %v332 = vsel %vm312, %v302, 0
        %v335 = vsel %vm312, %v303, 0
        %v338 = vsel %vm312, %v304, 0
        %340 = vmatprep.subr.mxu0 0.0
        %341 = vmatpush1.xpose.msra.mxu0 %v317
        %342 = vmatprep.subr.mxu0 0.0
        %343 = vmatpush1.xpose.msra.mxu0 %v320
        %344 = vmatprep.subr.mxu0 0.0
        %345 = vmatpush1.xpose.msra.mxu0 %v323
        %346 = vmatprep.subr.mxu0 0.0
        %347 = vmatpush1.xpose.msra.mxu0 %v326
        %348 = vmatprep.subr.mxu0 0.0
        %349 = vmatpush1.xpose.msra.mxu0 %v329
        %350 = vmatprep.subr.mxu0 0.0
        %351 = vmatpush1.xpose.msra.mxu0 %v332
        %352 = vmatprep.subr.mxu0 0.0
        %353 = vmatpush1.xpose.msra.mxu0 %v335
        %354 = vmatprep.subr.mxu0 0.0
        %355 = vmatpush1.xpose.msra.mxu0 %v338
        %356 = vmatprep.subr.mxu0 0.0
        %357 = vmatpush1.xpose.msra.mxu0 0.0
        %358 = vmatprep.subr.mxu0 0.0
        %359 = vmatpush1.xpose.msra.mxu0 0.0
        %360 = vmatprep.subr.mxu0 0.0
        %361 = vmatpush1.xpose.msra.mxu0 0.0
        %362 = vmatprep.subr.mxu0 0.0
        %363 = vmatpush1.xpose.msra.mxu0 0.0
        %364 = vmatprep.subr.mxu0 0.0
        %365 = vmatpush1.xpose.msra.mxu0 0.0
        %366 = vmatprep.subr.mxu0 0.0
        %367 = vmatpush1.xpose.msra.mxu0 0.0
        %368 = vmatprep.subr.mxu0 0.0
        %369 = vmatpush1.xpose.msra.mxu0 0.0
        %370 = vmatprep.subr.mxu0 0.0
        %371 = vmatpush1.xpose.msra.mxu0 0.0
        %372 = vmatprep.subr.mxu0 0.0
        %373 = vmatpush1.xpose.msra.mxu0 0.0
        %374 = vmatprep.subr.mxu0 0.0
        %375 = vmatpush1.xpose.msra.mxu0 0.0
        %376 = vmatprep.subr.mxu0 0.0
        %377 = vmatpush1.xpose.msra.mxu0 0.0
        %378 = vmatprep.subr.mxu0 0.0
        %379 = vmatpush1.xpose.msra.mxu0 0.0
        %380 = vmatprep.subr.mxu0 0.0
        %381 = vmatpush1.xpose.msra.mxu0 0.0
        %382 = vmatprep.subr.mxu0 0.0
        %383 = vmatpush1.xpose.msra.mxu0 0.0
        %384 = vmatprep.subr.mxu0 0.0
        %385 = vmatpush1.xpose.msra.mxu0 0.0
        %386 = vmatprep.subr.mxu0 0.0
        %387 = vmatpush1.xpose.msra.mxu0 0.0
        %388 = vmatprep.subr.mxu0 0.0
        %389 = vmatpush1.xpose.msra.mxu0 0.0
        %390 = vmatprep.subr.mxu0 0.0
        %391 = vmatpush1.xpose.msra.mxu0 0.0
        %392 = vmatprep.subr.mxu0 0.0
        %393 = vmatpush1.xpose.msra.mxu0 0.0
        %394 = vmatprep.subr.mxu0 0.0
        %395 = vmatpush1.xpose.msra.mxu0 0.0
        %396 = vmatprep.subr.mxu0 0.0
        %397 = vmatpush1.xpose.msra.mxu0 0.0
        %398 = vmatprep.subr.mxu0 0.0
        %399 = vmatpush1.xpose.msra.mxu0 0.0
        %400 = vmatprep.subr.mxu0 0.0
        %401 = vmatpush1.xpose.msra.mxu0 0.0
        %402 = vmatprep.subr.mxu0 0.0
        %403 = vmatpush1.xpose.msra.mxu0 0.0
        %404 = vmatprep.mubr.f32.mxu0 0.0
        %405 = vmatmul.mubr.f32.gmra.mrb[0].mxu0 %v314
        %v406 = vpop.f32.mrb[0].mxu0
        %v407 = vadd.f32 %v310, %v406
        %v408 = vpop.f32.mrb[0].mxu0
        %409 = vdwg.mxu0
        %v410 = vmul.f32 %v407, 0.5
        %v411 = vmul.f32 %v407, 0.70710677
        %v412 = verf.f32.pop %v411
        %v413 = vadd.f32 %v412, 1.0
        %v414 = vmul.f32 %v410, %v413
        %v415 = vld [vmem:[#allocation2] sm:$0xff]
        %v416 = vld [vmem:[%s288] sm:$0xff]
        %v417 = vld [vmem:[%s288 + $0x8] sm:$0xff]
        %v418 = vld [vmem:[%s288 + $0x10] sm:$0xff]
        %v419 = vld [vmem:[%s288 + $0x18] sm:$0xff]
        %v420 = vld [vmem:[%s288 + $0x20] sm:$0xff]
        %v421 = vld [vmem:[%s288 + $0x28] sm:$0xff]
        %v422 = vld [vmem:[%s288 + $0x30] sm:$0xff]
        %v423 = vld [vmem:[%s288 + $0x38] sm:$0xff]
        %vm424 = vcmask 523264
        %v426 = vsel %vm424, %v414, 0
        %428 = vmatprep.subr.mxu0 0.0
        %429 = vmatpush1.msra.mxu0 %v416
        %430 = vmatprep.subr.mxu0 0.0
        %431 = vmatpush1.msra.mxu0 %v417
        %432 = vmatprep.subr.mxu0 0.0
        %433 = vmatpush1.msra.mxu0 %v418
        %434 = vmatprep.subr.mxu0 0.0
        %435 = vmatpush1.msra.mxu0 %v419
        %436 = vmatprep.subr.mxu0 0.0
        %437 = vmatpush1.msra.mxu0 %v420
        %438 = vmatprep.subr.mxu0 0.0
        %439 = vmatpush1.msra.mxu0 %v421
        %440 = vmatprep.subr.mxu0 0.0
        %441 = vmatpush1.msra.mxu0 %v422
        %442 = vmatprep.subr.mxu0 0.0
        %443 = vmatpush1.msra.mxu0 %v423
        %444 = vmatprep.subr.mxu0 0.0
        %445 = vmatpush1.msra.mxu0 0.0
        %446 = vmatprep.subr.mxu0 0.0
        %447 = vmatpush1.msra.mxu0 0.0
        %448 = vmatprep.subr.mxu0 0.0
        %449 = vmatpush1.msra.mxu0 0.0
        %450 = vmatprep.subr.mxu0 0.0
        %451 = vmatpush1.msra.mxu0 0.0
        %452 = vmatprep.subr.mxu0 0.0
        %453 = vmatpush1.msra.mxu0 0.0
        %454 = vmatprep.subr.mxu0 0.0
        %455 = vmatpush1.msra.mxu0 0.0
        %456 = vmatprep.subr.mxu0 0.0
        %457 = vmatpush1.msra.mxu0 0.0
        %458 = vmatprep.subr.mxu0 0.0
        %459 = vmatpush1.msra.mxu0 0.0
        %460 = vmatprep.subr.mxu0 0.0
        %461 = vmatpush1.msra.mxu0 0.0
        %462 = vmatprep.subr.mxu0 0.0
        %463 = vmatpush1.msra.mxu0 0.0
        %464 = vmatprep.subr.mxu0 0.0
        %465 = vmatpush1.msra.mxu0 0.0
        %466 = vmatprep.subr.mxu0 0.0
        %467 = vmatpush1.msra.mxu0 0.0
        %468 = vmatprep.subr.mxu0 0.0
        %469 = vmatpush1.msra.mxu0 0.0
        %470 = vmatprep.subr.mxu0 0.0
        %471 = vmatpush1.msra.mxu0 0.0
        %472 = vmatprep.subr.mxu0 0.0
        %473 = vmatpush1.msra.mxu0 0.0
        %474 = vmatprep.subr.mxu0 0.0
        %475 = vmatpush1.msra.mxu0 0.0
        %476 = vmatprep.subr.mxu0 0.0
        %477 = vmatpush1.msra.mxu0 0.0
        %478 = vmatprep.subr.mxu0 0.0
        %479 = vmatpush1.msra.mxu0 0.0
        %480 = vmatprep.subr.mxu0 0.0
        %481 = vmatpush1.msra.mxu0 0.0
        %482 = vmatprep.subr.mxu0 0.0
        %483 = vmatpush1.msra.mxu0 0.0
        %484 = vmatprep.subr.mxu0 0.0
        %485 = vmatpush1.msra.mxu0 0.0
        %486 = vmatprep.subr.mxu0 0.0
        %487 = vmatpush1.msra.mxu0 0.0
        %488 = vmatprep.subr.mxu0 0.0
        %489 = vmatpush1.msra.mxu0 0.0
        %490 = vmatprep.subr.mxu0 0.0
        %491 = vmatpush1.msra.mxu0 0.0
        %492 = vmatprep.mubr.f32.mxu0 0.0
        %493 = vmatmul.mubr.f32.gmra.mrb[0].mxu0 %v426
        %v494 = vpop.f32.mrb[0].mxu0
        %v495 = vadd.f32 0.0, %v494
        %v496 = vpop.f32.mrb[0].mxu0
        %497 = vdwg.mxu0
        %v498 = vadd.f32 %v415, %v495
        %499 = vst.msk [vmem:[#allocation2] sm:$0xff] %vm312, %v498
        // Predicated region
        $region45: #{feed_forward.1} parent=39 // pred_check
          %p500 = pneg %p290
        $region46: #{feed_forward.1} parent=39 // pred_check_branch
          %502 = sbr.rel (%p500) target = $region48
        $region47: #{feed_forward.1} parent=39 // pred_region
          %v503 = vld [vmem:[#allocation2] sm:$0xff]
          %v504 = vld [vmem:[%s4] sm:$0x1]
          %v506 = vlaneseq
          %v507 = vshrl.u32 %v506, 7
          %v508 = vsub.s32 0, %v507
          %v509 = vrot.slane %v504, %v508
          %v511 = vadd.f32 %v503, %v509
          %512 = vst.msk [vmem:[%s270] sm:$0xff] %vm312, %v511
        $region48: #{feed_forward.1} parent=39 // pred_fallthru
          _
        %s513 = sand.u32 %s164, 1
        %s514 = scalar_lea.sflag [#allocation4], %s513
        %s515 = sand.u32 %s164, 1
        %s516 = smul.addr %s515, 8
        %s517 = scalar_lea.vmem [#allocation3], %s516
        // Predicated region
        $region49: #{feed_forward.1} parent=39 // pred_check
          %p518 = pneg %p174
        $region50: #{feed_forward.1} parent=39 // pred_check_branch
          %520 = sbr.rel (%p518) target = $region52
        $region51: #{feed_forward.1} parent=39 // pred_region
          %s522 = ssub.s32 128, 128
          %523 = vsyncadd %s514, %s522
          %s524 = smul.addr %s23, 128
          %s525 = scalar_lea.hbm %s5, %s524
          %s527 = sshll.u32 %s517, 4
          %s528 = int_to_ptr.vmem [resolvable:$true] %s527
          %530 = dma.vmem_to_hbm [thread:$0]  %s528, 128, %s525, %s514
        $region52: #{feed_forward.1} parent=39 // pred_fallthru
          _
      $region40: #{feed_forward.1} parent=5 // pred_fallthru
        _
      %p531 = scmp.le.s32.totalorder 2, %s14
      // Predicated region
      $region53: #{feed_forward.1} parent=5 // pred_check
        %p532 = pneg %p531
      $region54: #{feed_forward.1} parent=5 // pred_check_branch
        %534 = sbr.rel (%p532) target = $region56
      $region55: #{feed_forward.1} parent=5 // pred_region
        %s535 = ssub.s32 %s14, 2
        // Predicated region
        $region57: #{feed_forward.1} parent=55 // pred_check
          %p536 = pneg %p180
        $region58: #{feed_forward.1} parent=55 // pred_check_branch
          %538 = sbr.rel (%p536) target = $region60
        $region59: #{feed_forward.1} parent=55 // pred_region
          %s539 = sand.u32 %s165, 1
          %s540 = scalar_lea.sflag [#allocation4], %s539
          %s541 = sand.u32 %s165, 1
          %s542 = smul.addr %s541, 8
          %s543 = scalar_lea.vmem [#allocation3], %s542
          %544 = dma.done %s540, 128
        $region60: #{feed_forward.1} parent=55 // pred_fallthru
          _
      $region56: #{feed_forward.1} parent=5 // pred_fallthru
        _
    $region6: #{feed_forward.1} parent=1 // loop_footer
      %s18 = sadd.s32 1, %s14
    $region7: #{feed_forward.1} parent=1 // loop_footer_branch
      %13 = sbr.rel target = $region3
    $region8: #{feed_forward.1} parent=1 // loop_exit
      _
    %545 = vsyncpa [#allocation4], 1
    %s546 = scalar_lea.sflag [#allocation4], 1
    %547 = vsyncpa %s546, 1

</llo_original>
